<compile_context>
chip_gen: v6e
topology: v6e:2x2x1
jax: 0.10.0
libtpu: 0.0.40
codegen_flags: <defaults>
</compile_context>

<pallas_src>
import functools

import jax
import jax.numpy as jnp
from jax.experimental import pallas as pl
from jax.experimental.pallas import tpu as pltpu

_LANE = 128
_SUBLANE = 8


def _round_up(x, m):
    return ((x + m - 1) // m) * m


def _cdiv(a, b):
    return (a + b - 1) // b


def _fused_mlp_kernel(*refs, n_layers):
    """refs = (x_ref, w0, w1, ..., w_{L-1}, bias_packed, o_ref).

    One batch tile flows through every layer without leaving VMEM:
      bf16 cast -> matmul (MXU, f32 acc) -> +bias (f32) -> ReLU -> bf16 -> next.
    """
    x_ref = refs[0]
    w_refs = refs[1:1 + n_layers]
    b_ref = refs[1 + n_layers]           # (n_layers, max_dpo) f32, VMEM resident
    o_ref = refs[2 + n_layers]

    h = x_ref[...].astype(jnp.bfloat16)  # (tm, Din) -> bf16 in-kernel (cheap VPU)
    for i in range(n_layers):
        dpo = int(w_refs[i].shape[1])    # static per-layer padded out dim
        y = jnp.dot(h, w_refs[i][...], preferred_element_type=jnp.float32)
        y = y + b_ref[i:i + 1, :dpo]     # static slice of packed bias, (1, dpo)
        if i < n_layers - 1:
            h = jnp.maximum(y, 0.0).astype(jnp.bfloat16)
        else:
            h = y                        # final logits stay f32
    o_ref[...] = h.astype(o_ref.dtype)


def prepare_mlp_params(params):
    """One-time pad/cast of MLP params (call OUTSIDE the per-step forward).

    params: list of (w: (d_in, d_out), b: (1, d_out) or (d_out,)) float arrays.
    Returns dict:
      weights: tuple of bf16 weights; hidden/output feature dims zero-padded to
               multiples of 128 (exact), first layer's input dim left unpadded
               so x can be consumed directly without an HBM padding pass.
      bias:    (n_layers, max_padded_out) f32, packed into a single array.
      out_dim: true (unpadded) output dim.
    """
    n_layers = len(params)
    in_dims = [int(w.shape[0]) for w, _ in params]
    out_dims = [int(w.shape[1]) for w, _ in params]
    for i in range(n_layers - 1):
        assert out_dims[i] == in_dims[i + 1], "layer dims must chain"

    in_dims_pad = [in_dims[0]] + [_round_up(d, _LANE) for d in in_dims[1:]]
    out_dims_pad = [_round_up(d, _LANE) for d in out_dims]
    max_dpo = max(out_dims_pad)

    weights = []
    bias = jnp.zeros((n_layers, max_dpo), jnp.float32)
    for li, (w, b) in enumerate(params):
        dpi, dpo = in_dims_pad[li], out_dims_pad[li]
        w_pad = jnp.zeros((dpi, dpo), jnp.bfloat16)
        w_pad = w_pad.at[: w.shape[0], : w.shape[1]].set(w.astype(jnp.bfloat16))
        weights.append(w_pad)
        bias = bias.at[li, : out_dims[li]].set(
            jnp.reshape(b, (-1,)).astype(jnp.float32))
    return {"weights": tuple(weights), "bias": bias, "out_dim": out_dims[-1]}


def _pick_batch_tiling(B, tile_m):
    """Balanced, 8-aligned batch tiles; >= 2 grid steps for mid-size batches so
    the 'parallel' batch axis can be sharded across both v7x TensorCores."""
    if B <= _SUBLANE:
        return B, 1                                  # full-extent block is legal
    B8 = _round_up(B, _SUBLANE)
    tile_m = max(_SUBLANE, (int(tile_m) // _SUBLANE) * _SUBLANE)
    n_tiles = _cdiv(B8, tile_m)
    if n_tiles < 2 and B8 >= 2 * _SUBLANE:
        n_tiles = 2
    tm = _round_up(_cdiv(B8, n_tiles), _SUBLANE)     # balanced: <8 pad rows/tile
    grid_m = _cdiv(B, tm)
    return tm, grid_m


def _vmem_capacity_bytes():
    try:
        cap = getattr(pltpu.get_tpu_info(), "vmem_capacity_bytes", None)
        if cap:
            return int(cap)
    except Exception:
        pass
    return 64 * 1024 * 1024  # conservative (v7x-sized) fallback


def mlp_classifier_forward(x, prepared, *, tile_m=512):
    """Fused MLP forward. x:(B, Din) f32, prepared = prepare_mlp_params(params)."""
    weights, bias, out_dim = prepared["weights"], prepared["bias"], prepared["out_dim"]
    n_layers = len(weights)
    B, Din = x.shape
    assert int(weights[0].shape[0]) == Din, "x feature dim mismatch with params"
    Dout_pad = int(weights[-1].shape[1])
    max_dim_pad = max([Din] + [int(w.shape[1]) for w in weights])

    tm, grid_m = _pick_batch_tiling(B, tile_m)

    # Advisory cost estimate for XLA scheduling of the single custom call.
    flops = 2 * B * sum(int(w.shape[0]) * int(w.shape[1]) for w in weights)
    param_bytes = sum(int(w.size) * 2 for w in weights) + int(bias.size) * 4
    bytes_accessed = B * Din * 4 + param_bytes + B * Dout_pad * 4

    # VMEM accounting: double-buffered x/out tiles, (single-buffered) resident
    # params, plus the in-flight f32 accumulator / bf16 h intermediates.
    io_tile_bytes = tm * Din * 4 + tm * Dout_pad * 4
    interm_bytes = 2 * tm * max_dim_pad * (4 + 2)
    cap = _vmem_capacity_bytes()

    def _call(single_buffer_params):
        if single_buffer_params:
            def param_spec(shape):
                # Grid-invariant block (index_map is constant) -> single buffer.
                return pl.BlockSpec(shape, lambda i: (0, 0),
                                    pipeline_mode=pl.Buffered(1))
            w_buf = 1
        else:
            def param_spec(shape):
                return pl.BlockSpec(shape, lambda i: (0, 0))
            w_buf = 2
        vmem_need = 2 * io_tile_bytes + w_buf * param_bytes + interm_bytes
        vmem_limit = int(min(max(1.25 * vmem_need, 32 * 1024 * 1024), 0.75 * cap))

        in_specs = [pl.BlockSpec((tm, Din), lambda i: (i, 0))]          # x: unpadded
        in_specs += [param_spec(tuple(w.shape)) for w in weights]       # resident
        in_specs += [param_spec(tuple(bias.shape))]                     # packed bias

        return pl.pallas_call(
            functools.partial(_fused_mlp_kernel, n_layers=n_layers),
            out_shape=jax.ShapeDtypeStruct((B, Dout_pad), jnp.float32),
            grid_spec=pltpu.PrefetchScalarGridSpec(
                num_scalar_prefetch=0,
                grid=(grid_m,),
                in_specs=in_specs,
                out_specs=pl.BlockSpec((tm, Dout_pad), lambda i: (i, 0)),
            ),
            compiler_params=pltpu.CompilerParams(
                dimension_semantics=("parallel",),
                vmem_limit_bytes=vmem_limit),
            cost_estimate=pl.CostEstimate(flops=flops, transcendentals=0,
                                          bytes_accessed=bytes_accessed),
        )(x, *weights, bias)

    try:
        out_pad = _call(single_buffer_params=True)
    except Exception:
        # Fallback for jax versions that reject pipeline_mode=pl.Buffered(1).
        out_pad = _call(single_buffer_params=False)

    return out_pad[:, :out_dim]


def init_mlp_params(key, input_dim, output_dim=41, hidden_layers=1,
                    hidden_dim=256, dtype=jnp.float32):
    """Deterministic init matching nn.Linear's U(-1/sqrt(fan_in), 1/sqrt(fan_in))."""
    dims = [input_dim] + [hidden_dim] * (1 + hidden_layers) + [output_dim]
    params = []
    for d_in, d_out in zip(dims[:-1], dims[1:]):
        key, kw, kb = jax.random.split(key, 3)
        bound = 1.0 / (d_in ** 0.5)
        w = jax.random.uniform(kw, (d_in, d_out), dtype, -bound, bound)
        b = jax.random.uniform(kb, (1, d_out), dtype, -bound, bound)
        params.append((w, b))
    return params


def _reference_forward_bf16(x, params):
    # Same bf16-matmul / f32-accumulate recipe as the kernel, in plain XLA.
    n = len(params)
    h = x.astype(jnp.bfloat16)
    for i, (w, b) in enumerate(params):
        y = jnp.dot(h, w.astype(jnp.bfloat16),
                    preferred_element_type=jnp.float32) + jnp.reshape(b, (1, -1))
        h = jnp.maximum(y, 0.0).astype(jnp.bfloat16) if i < n - 1 else y
    return h


def _reference_forward_f32(x, params):
    # True f32 semantics of the PyTorch MLPClassifier (for a loose sanity check).
    n = len(params)
    h = x
    for i, (w, b) in enumerate(params):
        y = h @ w + jnp.reshape(b, (1, -1))
        h = jnp.maximum(y, 0.0) if i < n - 1 else y
    return h


if __name__ == "__main__":
    key = jax.random.PRNGKey(0)
    k_x, k_p = jax.random.split(key)

    batch, input_dim = 16, 32
    output_dim, hidden_layers, hidden_dim = 41, 1, 64

    x = jax.random.normal(k_x, (batch, input_dim), jnp.float32)
    params = init_mlp_params(k_p, input_dim, output_dim=output_dim,
                             hidden_layers=hidden_layers, hidden_dim=hidden_dim)

    prepared = prepare_mlp_params(params)        # one-time pad/cast (hoisted)

    out = mlp_classifier_forward(x, prepared)
    out = jax.block_until_ready(out)
    assert out.shape == (batch, output_dim)

    ref_bf16 = _reference_forward_bf16(x, params)
    err_bf16 = float(jnp.max(jnp.abs(out - ref_bf16)))
    assert jnp.allclose(out, ref_bf16, atol=5e-3, rtol=5e-3), \
        f"max abs err vs bf16 recipe {err_bf16}"

    ref_f32 = _reference_forward_f32(x, params)
    err_f32 = float(jnp.max(jnp.abs(out - ref_f32)))
    assert jnp.allclose(out, ref_f32, atol=1e-1, rtol=1e-1), \
        f"max abs err vs f32 reference {err_f32}"

    print("KERNEL_OK")
</pallas_src>

<mosaic_0001>
module attributes {stable_mosaic.version = 11 : i64} {
  func.func @_fused_mlp_kernel(%arg0: i32, %arg1: memref<8x32xf32, #tpu.memory_space<vmem>>, %arg2: memref<32x128xbf16, #tpu.memory_space<vmem>>, %arg3: memref<128x128xbf16, #tpu.memory_space<vmem>>, %arg4: memref<128x128xbf16, #tpu.memory_space<vmem>>, %arg5: memref<3x128xf32, #tpu.memory_space<vmem>>, %arg6: memref<8x128xf32, #tpu.memory_space<vmem>>) attributes {dimension_semantics = [#tpu.dimension_semantics<parallel>], iteration_bounds = array<i64: 2>, scalar_prefetch = 0 : i64, scratch_operands = 0 : i64, tpu.core_type = #tpu.core_type<tc>, window_params = [{transform_indices = @transform_0, window_bounds = array<i64: 8, 32>}, {pipeline_mode = #tpu.pipeline_mode<synchronous>, transform_indices = @transform_1, window_bounds = array<i64: 32, 128>}, {pipeline_mode = #tpu.pipeline_mode<synchronous>, transform_indices = @transform_2, window_bounds = array<i64: 128, 128>}, {pipeline_mode = #tpu.pipeline_mode<synchronous>, transform_indices = @transform_3, window_bounds = array<i64: 128, 128>}, {pipeline_mode = #tpu.pipeline_mode<synchronous>, transform_indices = @transform_4, window_bounds = array<i64: 3, 128>}, {transform_indices = @transform_5, window_bounds = array<i64: 8, 128>}]} {
    %c0 = arith.constant 0 : index
    %c0_0 = arith.constant 0 : index
    %0 = vector.load %arg1[%c0, %c0_0] : memref<8x32xf32, #tpu.memory_space<vmem>>, vector<8x32xf32>
    %1 = arith.truncf %0 : vector<8x32xf32> to vector<8x32xbf16>
    %c0_1 = arith.constant 0 : index
    %c0_2 = arith.constant 0 : index
    %2 = vector.load %arg2[%c0_1, %c0_2] : memref<32x128xbf16, #tpu.memory_space<vmem>>, vector<32x128xbf16>
    %cst = arith.constant dense<0.000000e+00> : vector<8x128xf32>
    %3 = tpu.matmul %1, %2, %cst {dimension_numbers = #tpu.dot_dimension_numbers<[1], [0], [0], [1], [0, 0, 1, 1], [], []>} : vector<8x32xbf16>, vector<32x128xbf16>, vector<8x128xf32> -> vector<8x128xf32>
    %c0_3 = arith.constant 0 : index
    %c0_4 = arith.constant 0 : index
    %4 = vector.load %arg5[%c0_3, %c0_4] : memref<3x128xf32, #tpu.memory_space<vmem>>, vector<1x128xf32>
    %5 = vector.broadcast %4 : vector<1x128xf32> to vector<8x128xf32>
    %6 = arith.addf %3, %5 : vector<8x128xf32>
    %cst_5 = arith.constant 0.000000e+00 : f32
    %7 = vector.broadcast %cst_5 : f32 to vector<8x128xf32>
    %8 = arith.maximumf %6, %7 : vector<8x128xf32>
    %9 = arith.truncf %8 : vector<8x128xf32> to vector<8x128xbf16>
    %c0_6 = arith.constant 0 : index
    %c0_7 = arith.constant 0 : index
    %10 = vector.load %arg3[%c0_6, %c0_7] : memref<128x128xbf16, #tpu.memory_space<vmem>>, vector<128x128xbf16>
    %cst_8 = arith.constant dense<0.000000e+00> : vector<8x128xf32>
    %11 = tpu.matmul %9, %10, %cst_8 {dimension_numbers = #tpu.dot_dimension_numbers<[1], [0], [0], [1], [0, 0, 1, 1], [], []>} : vector<8x128xbf16>, vector<128x128xbf16>, vector<8x128xf32> -> vector<8x128xf32>
    %c1 = arith.constant 1 : index
    %c0_9 = arith.constant 0 : index
    %12 = vector.load %arg5[%c1, %c0_9] : memref<3x128xf32, #tpu.memory_space<vmem>>, vector<1x128xf32>
    %13 = vector.broadcast %12 : vector<1x128xf32> to vector<8x128xf32>
    %14 = arith.addf %11, %13 : vector<8x128xf32>
    %cst_10 = arith.constant 0.000000e+00 : f32
    %15 = vector.broadcast %cst_10 : f32 to vector<8x128xf32>
    %16 = arith.maximumf %14, %15 : vector<8x128xf32>
    %17 = arith.truncf %16 : vector<8x128xf32> to vector<8x128xbf16>
    %c0_11 = arith.constant 0 : index
    %c0_12 = arith.constant 0 : index
    %18 = vector.load %arg4[%c0_11, %c0_12] : memref<128x128xbf16, #tpu.memory_space<vmem>>, vector<128x128xbf16>
    %cst_13 = arith.constant dense<0.000000e+00> : vector<8x128xf32>
    %19 = tpu.matmul %17, %18, %cst_13 {dimension_numbers = #tpu.dot_dimension_numbers<[1], [0], [0], [1], [0, 0, 1, 1], [], []>} : vector<8x128xbf16>, vector<128x128xbf16>, vector<8x128xf32> -> vector<8x128xf32>
    %c2 = arith.constant 2 : index
    %c0_14 = arith.constant 0 : index
    %20 = vector.load %arg5[%c2, %c0_14] : memref<3x128xf32, #tpu.memory_space<vmem>>, vector<1x128xf32>
    %21 = vector.broadcast %20 : vector<1x128xf32> to vector<8x128xf32>
    %22 = arith.addf %19, %21 : vector<8x128xf32>
    %c0_15 = arith.constant 0 : index
    %c0_16 = arith.constant 0 : index
    %23 = vector.load %arg6[%c0_15, %c0_16] : memref<8x128xf32, #tpu.memory_space<vmem>>, vector<8x128xf32>
    tpu.vector_store %arg6[%c0_15, %c0_16], %22 {strides = array<i32>} : memref<8x128xf32, #tpu.memory_space<vmem>>, vector<8x128xf32>,
    return
  }
  func.func @transform_0(%arg0: i32) -> (i32, i32) {
    %c0_i32 = arith.constant 0 : i32
    %c0_i32_0 = arith.constant 0 : i32
    return %arg0, %c0_i32 : i32, i32
  }
  func.func @transform_1(%arg0: i32) -> (i32, i32) {
    %c0_i32 = arith.constant 0 : i32
    %c0_i32_0 = arith.constant 0 : i32
    %c0_i32_1 = arith.constant 0 : i32
    return %c0_i32, %c0_i32_0 : i32, i32
  }
  func.func @transform_2(%arg0: i32) -> (i32, i32) {
    %c0_i32 = arith.constant 0 : i32
    %c0_i32_0 = arith.constant 0 : i32
    %c0_i32_1 = arith.constant 0 : i32
    return %c0_i32, %c0_i32_0 : i32, i32
  }
  func.func @transform_3(%arg0: i32) -> (i32, i32) {
    %c0_i32 = arith.constant 0 : i32
    %c0_i32_0 = arith.constant 0 : i32
    %c0_i32_1 = arith.constant 0 : i32
    return %c0_i32, %c0_i32_0 : i32, i32
  }
  func.func @transform_4(%arg0: i32) -> (i32, i32) {
    %c0_i32 = arith.constant 0 : i32
    %c0_i32_0 = arith.constant 0 : i32
    %c0_i32_1 = arith.constant 0 : i32
    return %c0_i32, %c0_i32_0 : i32, i32
  }
  func.func @transform_5(%arg0: i32) -> (i32, i32) {
    %c0_i32 = arith.constant 0 : i32
    %c0_i32_0 = arith.constant 0 : i32
    return %arg0, %c0_i32 : i32, i32
  }
}

module attributes {stable_mosaic.version = 11 : i64} {
  func.func @_fused_mlp_kernel(%arg0: i32, %arg1: memref<8x32xf32, #tpu.memory_space<vmem>>, %arg2: memref<32x128xbf16, #tpu.memory_space<vmem>>, %arg3: memref<128x128xbf16, #tpu.memory_space<vmem>>, %arg4: memref<128x128xbf16, #tpu.memory_space<vmem>>, %arg5: memref<3x128xf32, #tpu.memory_space<vmem>>, %arg6: memref<8x128xf32, #tpu.memory_space<vmem>>) attributes {dimension_semantics = [#tpu.dimension_semantics<parallel>], iteration_bounds = array<i64: 2>, scalar_prefetch = 0 : i64, scratch_operands = 0 : i64, tpu.core_type = #tpu.core_type<tc>, window_params = [{transform_indices = @transform_0, window_bounds = array<i64: 8, 32>}, {pipeline_mode = #tpu.pipeline_mode<synchronous>, transform_indices = @transform_1, window_bounds = array<i64: 32, 128>}, {pipeline_mode = #tpu.pipeline_mode<synchronous>, transform_indices = @transform_2, window_bounds = array<i64: 128, 128>}, {pipeline_mode = #tpu.pipeline_mode<synchronous>, transform_indices = @transform_3, window_bounds = array<i64: 128, 128>}, {pipeline_mode = #tpu.pipeline_mode<synchronous>, transform_indices = @transform_4, window_bounds = array<i64: 3, 128>}, {transform_indices = @transform_5, window_bounds = array<i64: 8, 128>}]} {
    %c0 = arith.constant 0 : index
    %c0_0 = arith.constant 0 : index
    %0 = vector.load %arg1[%c0, %c0_0] : memref<8x32xf32, #tpu.memory_space<vmem>>, vector<8x32xf32>
    %1 = arith.truncf %0 : vector<8x32xf32> to vector<8x32xbf16>
    %c0_1 = arith.constant 0 : index
    %c0_2 = arith.constant 0 : index
    %2 = vector.load %arg2[%c0_1, %c0_2] : memref<32x128xbf16, #tpu.memory_space<vmem>>, vector<32x128xbf16>
    %cst = arith.constant dense<0.000000e+00> : vector<8x128xf32>
    %3 = tpu.matmul %1, %2, %cst {dimension_numbers = #tpu.dot_dimension_numbers<[1], [0], [0], [1], [0, 0, 1, 1], [], []>} : vector<8x32xbf16>, vector<32x128xbf16>, vector<8x128xf32> -> vector<8x128xf32>
    %c0_3 = arith.constant 0 : index
    %c0_4 = arith.constant 0 : index
    %4 = vector.load %arg5[%c0_3, %c0_4] : memref<3x128xf32, #tpu.memory_space<vmem>>, vector<1x128xf32>
    %5 = vector.broadcast %4 : vector<1x128xf32> to vector<8x128xf32>
    %6 = arith.addf %3, %5 : vector<8x128xf32>
    %cst_5 = arith.constant 0.000000e+00 : f32
    %7 = vector.broadcast %cst_5 : f32 to vector<8x128xf32>
    %8 = arith.maximumf %6, %7 : vector<8x128xf32>
    %9 = arith.truncf %8 : vector<8x128xf32> to vector<8x128xbf16>
    %c0_6 = arith.constant 0 : index
    %c0_7 = arith.constant 0 : index
    %10 = vector.load %arg3[%c0_6, %c0_7] : memref<128x128xbf16, #tpu.memory_space<vmem>>, vector<128x128xbf16>
    %cst_8 = arith.constant dense<0.000000e+00> : vector<8x128xf32>
    %11 = tpu.matmul %9, %10, %cst_8 {dimension_numbers = #tpu.dot_dimension_numbers<[1], [0], [0], [1], [0, 0, 1, 1], [], []>} : vector<8x128xbf16>, vector<128x128xbf16>, vector<8x128xf32> -> vector<8x128xf32>
    %c1 = arith.constant 1 : index
    %c0_9 = arith.constant 0 : index
    %12 = vector.load %arg5[%c1, %c0_9] : memref<3x128xf32, #tpu.memory_space<vmem>>, vector<1x128xf32>
    %13 = vector.broadcast %12 : vector<1x128xf32> to vector<8x128xf32>
    %14 = arith.addf %11, %13 : vector<8x128xf32>
    %cst_10 = arith.constant 0.000000e+00 : f32
    %15 = vector.broadcast %cst_10 : f32 to vector<8x128xf32>
    %16 = arith.maximumf %14, %15 : vector<8x128xf32>
    %17 = arith.truncf %16 : vector<8x128xf32> to vector<8x128xbf16>
    %c0_11 = arith.constant 0 : index
    %c0_12 = arith.constant 0 : index
    %18 = vector.load %arg4[%c0_11, %c0_12] : memref<128x128xbf16, #tpu.memory_space<vmem>>, vector<128x128xbf16>
    %cst_13 = arith.constant dense<0.000000e+00> : vector<8x128xf32>
    %19 = tpu.matmul %17, %18, %cst_13 {dimension_numbers = #tpu.dot_dimension_numbers<[1], [0], [0], [1], [0, 0, 1, 1], [], []>} : vector<8x128xbf16>, vector<128x128xbf16>, vector<8x128xf32> -> vector<8x128xf32>
    %c2 = arith.constant 2 : index
    %c0_14 = arith.constant 0 : index
    %20 = vector.load %arg5[%c2, %c0_14] : memref<3x128xf32, #tpu.memory_space<vmem>>, vector<1x128xf32>
    %21 = vector.broadcast %20 : vector<1x128xf32> to vector<8x128xf32>
    %22 = arith.addf %19, %21 : vector<8x128xf32>
    %c0_15 = arith.constant 0 : index
    %c0_16 = arith.constant 0 : index
    %23 = vector.load %arg6[%c0_15, %c0_16] : memref<8x128xf32, #tpu.memory_space<vmem>>, vector<8x128xf32>
    tpu.vector_store %arg6[%c0_15, %c0_16], %22 {strides = array<i32>} : memref<8x128xf32, #tpu.memory_space<vmem>>, vector<8x128xf32>,
    return
  }
  func.func @transform_0(%arg0: i32) -> (i32, i32) {
    %c0_i32 = arith.constant 0 : i32
    %c0_i32_0 = arith.constant 0 : i32
    return %arg0, %c0_i32 : i32, i32
  }
  func.func @transform_1(%arg0: i32) -> (i32, i32) {
    %c0_i32 = arith.constant 0 : i32
    %c0_i32_0 = arith.constant 0 : i32
    %c0_i32_1 = arith.constant 0 : i32
    return %c0_i32, %c0_i32_0 : i32, i32
  }
  func.func @transform_2(%arg0: i32) -> (i32, i32) {
    %c0_i32 = arith.constant 0 : i32
    %c0_i32_0 = arith.constant 0 : i32
    %c0_i32_1 = arith.constant 0 : i32
    return %c0_i32, %c0_i32_0 : i32, i32
  }
  func.func @transform_3(%arg0: i32) -> (i32, i32) {
    %c0_i32 = arith.constant 0 : i32
    %c0_i32_0 = arith.constant 0 : i32
    %c0_i32_1 = arith.constant 0 : i32
    return %c0_i32, %c0_i32_0 : i32, i32
  }
  func.func @transform_4(%arg0: i32) -> (i32, i32) {
    %c0_i32 = arith.constant 0 : i32
    %c0_i32_0 = arith.constant 0 : i32
    %c0_i32_1 = arith.constant 0 : i32
    return %c0_i32, %c0_i32_0 : i32, i32
  }
  func.func @transform_5(%arg0: i32) -> (i32, i32) {
    %c0_i32 = arith.constant 0 : i32
    %c0_i32_0 = arith.constant 0 : i32
    return %arg0, %c0_i32 : i32, i32
  }
}

</mosaic_0001>

<llo_original>
// kernel: tpu_custom_call.1
$region0: #{tpu_custom_call.1}
  #allocation0 [shape = 'u32[]', space=smem, size = 0x4, offset = 0x4, fixed_abs, tag = 'smem constant byte address 0x4 - core index']
  #allocation1 [shape = 'u32[144,128]{1,0:T(1,128)}', space=vmem, size = 0x12000, scoped, tag = 'internal scratch']
  %s0 = inlined_call_operand.hbm [shape: f32[16,32], index: 0, kind: input, shape index: {}]
  %s1 = inlined_call_operand.hbm [shape: bf16[32,128], index: 1, kind: input, shape index: {}]
  %s2 = inlined_call_operand.hbm [shape: bf16[128,128], index: 2, kind: input, shape index: {}]
  %s3 = inlined_call_operand.hbm [shape: bf16[128,128], index: 3, kind: input, shape index: {}]
  %s4 = inlined_call_operand.vmem [shape: f32[3,128], index: 4, kind: input, shape index: {}]
  %s5 = inlined_call_operand.hbm [shape: f32[16,128], index: 5, kind: output, shape index: {}]
  %s6 = sld [smem:[#allocation0]]
  $region69: #{tpu_custom_call.1} parent=0
    _
  %s8 = ssub.s32 1, %s6
  %s9 = scalar_select 0, %s8, %s6
  $region1: #{tpu_custom_call.1} parent=0
    #allocation2 [shape = 'u8[8192]{0}', space=vmem, size = 0x2000, scoped, tag = 'input window, operand 0']
    #allocation3 [shape = 's32[2]{0}', space=sflag, size = 0x8, scoped, tag = 'scoped memory for tpu_custom_call.1']
    #allocation4 [shape = 's32[2]{0}', space=sflag, size = 0x8, scoped, tag = 'scoped memory for tpu_custom_call.1']
    #allocation5 [shape = 'u8[8192]{0}', space=vmem, size = 0x2000, scoped, tag = 'input window, operand 1, single buffered']
    #allocation6 [shape = 's32[1]{0}', space=sflag, size = 0x4, scoped, tag = 'scoped memory for tpu_custom_call.1']
    #allocation7 [shape = 'u8[32768]{0}', space=vmem, size = 0x8000, scoped, tag = 'input window, operand 2, single buffered']
    #allocation8 [shape = 'u8[32768]{0}', space=vmem, size = 0x8000, scoped, tag = 'input window, operand 3, single buffered']
    #allocation9 [shape = 's32[1]{0}', space=sflag, size = 0x4, scoped, tag = 'scoped memory for tpu_custom_call.1']
    #allocation10 [shape = 'u8[8192]{0}', space=vmem, size = 0x2000, scoped, tag = 'output window, operand 0']
    %10 = vsyncpa [#allocation3], 0
    %s11 = scalar_lea.sflag [#allocation3], 1
    %12 = vsyncpa %s11, 0
    %13 = vsyncpa [#allocation6], 0
    %14 = vsyncpa [#allocation9], 0
    %15 = vsyncpa [#allocation4], 0
    %s16 = scalar_lea.sflag [#allocation4], 1
    %17 = vsyncpa %s16, 0
    loop: start=0, step=1, limit=4
    $region2: #{tpu_custom_call.1} parent=1 // loop_pre_header
      _
    $region3: #{tpu_custom_call.1} parent=1 // loop_header
      %s19 = sphi 0, %s23
      %p20 = scmp.ge.s32.totalorder %s19, 4
      %s29 = sphi 0, %s31
      %s32 = sphi 0, %s29
      %s33 = sphi 0, %s32
      %s49 = sphi 0, %s33
      %s53 = sphi 0, %s53
      %s55 = sphi 0, %s53
      %s56 = sphi 0, %s55
      %s70 = sphi 0, %s56
      %s74 = sphi 0, %s74
      %s76 = sphi 0, %s74
      %s77 = sphi 0, %s76
      %s91 = sphi 0, %s77
      %s95 = sphi 0, %s95
      %s97 = sphi 0, %s95
      %s98 = sphi 0, %s97
      %s112 = sphi 0, %s98
      %s116 = sphi 0, %s116
      %s118 = sphi 0, %s116
      %s119 = sphi 0, %s118
      %s133 = sphi 0, %s119
      %s139 = sphi 0, %s141
      %s142 = sphi 0, %s139
      %s143 = sphi 0, %s142
      %s159 = sphi 0, %s143
    $region4: #{tpu_custom_call.1} parent=1 // loop_header_branch
      %22 = sbr.rel (%p20) target = $region8
    $region5: #{tpu_custom_call.1} parent=1 // loop_body
      %s24 = ssub.s32 %s19, 1
      %s25 = ssub.s32 %s19, 2
      %s26 = sadd.s32 %s19, 1
      %s27 = ssub.s32 %s19, %s26
      %p28 = scmp.eq.s32.totalorder %s27, 0
      %s30 = sadd.s32 %s29, 1
      %s31 = scalar_select %p28, %s29, %s30
      %p34 = pneg %p28
      %p35 = scmp.eq.s32.totalorder %s19, 1
      %p36 = por %p34, %p35
      %p37 = scmp.ne.s32.totalorder %s29, %s32
      %p38 = scmp.eq.s32.totalorder %s19, 0
      %p39 = por %p37, %p38
      %p40 = scmp.ne.s32.totalorder %s29, %s32
      %p41 = scmp.eq.s32.totalorder %s24, 1
      %p42 = por %p40, %p41
      %p43 = scmp.ne.s32.totalorder %s32, %s33
      %p44 = scmp.eq.s32.totalorder %s24, 0
      %p45 = por %p43, %p44
      %p46 = scmp.ne.s32.totalorder %s32, %s33
      %p47 = scmp.eq.s32.totalorder %s25, 1
      %p48 = por %p46, %p47
      %p50 = scmp.ne.s32.totalorder %s33, %s49
      %p51 = scmp.eq.s32.totalorder %s25, 0
      %p52 = por %p50, %p51
      %s54 = sadd.s32 %s53, 1
      %p57 = scmp.eq.s32.totalorder %s19, 1
      %p58 = scmp.ne.s32.totalorder %s53, %s55
      %p59 = scmp.eq.s32.totalorder %s19, 0
      %p60 = por %p58, %p59
      %p61 = scmp.ne.s32.totalorder %s53, %s55
      %p62 = scmp.eq.s32.totalorder %s24, 1
      %p63 = por %p61, %p62
      %p64 = scmp.ne.s32.totalorder %s55, %s56
      %p65 = scmp.eq.s32.totalorder %s24, 0
      %p66 = por %p64, %p65
      %p67 = scmp.ne.s32.totalorder %s55, %s56
      %p68 = scmp.eq.s32.totalorder %s25, 1
      %p69 = por %p67, %p68
      %p71 = scmp.ne.s32.totalorder %s56, %s70
      %p72 = scmp.eq.s32.totalorder %s25, 0
      %p73 = por %p71, %p72
      %s75 = sadd.s32 %s74, 1
      %p78 = scmp.eq.s32.totalorder %s19, 1
      %p79 = scmp.ne.s32.totalorder %s74, %s76
      %p80 = scmp.eq.s32.totalorder %s19, 0
      %p81 = por %p79, %p80
      %p82 = scmp.ne.s32.totalorder %s74, %s76
      %p83 = scmp.eq.s32.totalorder %s24, 1
      %p84 = por %p82, %p83
      %p85 = scmp.ne.s32.totalorder %s76, %s77
      %p86 = scmp.eq.s32.totalorder %s24, 0
      %p87 = por %p85, %p86
      %p88 = scmp.ne.s32.totalorder %s76, %s77
      %p89 = scmp.eq.s32.totalorder %s25, 1
      %p90 = por %p88, %p89
      %p92 = scmp.ne.s32.totalorder %s77, %s91
      %p93 = scmp.eq.s32.totalorder %s25, 0
      %p94 = por %p92, %p93
      %s96 = sadd.s32 %s95, 1
      %p99 = scmp.eq.s32.totalorder %s19, 1
      %p100 = scmp.ne.s32.totalorder %s95, %s97
      %p101 = scmp.eq.s32.totalorder %s19, 0
      %p102 = por %p100, %p101
      %p103 = scmp.ne.s32.totalorder %s95, %s97
      %p104 = scmp.eq.s32.totalorder %s24, 1
      %p105 = por %p103, %p104
      %p106 = scmp.ne.s32.totalorder %s97, %s98
      %p107 = scmp.eq.s32.totalorder %s24, 0
      %p108 = por %p106, %p107
      %p109 = scmp.ne.s32.totalorder %s97, %s98
      %p110 = scmp.eq.s32.totalorder %s25, 1
      %p111 = por %p109, %p110
      %p113 = scmp.ne.s32.totalorder %s98, %s112
      %p114 = scmp.eq.s32.totalorder %s25, 0
      %p115 = por %p113, %p114
      %s117 = sadd.s32 %s116, 1
      %p120 = scmp.eq.s32.totalorder %s19, 1
      %p121 = scmp.ne.s32.totalorder %s116, %s118
      %p122 = scmp.eq.s32.totalorder %s19, 0
      %p123 = por %p121, %p122
      %p124 = scmp.ne.s32.totalorder %s116, %s118
      %p125 = scmp.eq.s32.totalorder %s24, 1
      %p126 = por %p124, %p125
      %p127 = scmp.ne.s32.totalorder %s118, %s119
      %p128 = scmp.eq.s32.totalorder %s24, 0
      %p129 = por %p127, %p128
      %p130 = scmp.ne.s32.totalorder %s118, %s119
      %p131 = scmp.eq.s32.totalorder %s25, 1
      %p132 = por %p130, %p131
      %p134 = scmp.ne.s32.totalorder %s119, %s133
      %p135 = scmp.eq.s32.totalorder %s25, 0
      %p136 = por %p134, %p135
      %s137 = ssub.s32 %s19, %s26
      %p138 = scmp.eq.s32.totalorder %s137, 0
      %s140 = sadd.s32 %s139, 1
      %s141 = scalar_select %p138, %s139, %s140
      %p144 = pneg %p138
      %p145 = scmp.eq.s32.totalorder %s19, 1
      %p146 = por %p144, %p145
      %p147 = scmp.ne.s32.totalorder %s139, %s142
      %p148 = scmp.eq.s32.totalorder %s19, 0
      %p149 = por %p147, %p148
      %p150 = scmp.ne.s32.totalorder %s139, %s142
      %p151 = scmp.eq.s32.totalorder %s24, 1
      %p152 = por %p150, %p151
      %p153 = scmp.ne.s32.totalorder %s142, %s143
      %p154 = scmp.eq.s32.totalorder %s24, 0
      %p155 = por %p153, %p154
      %p156 = scmp.ne.s32.totalorder %s142, %s143
      %p157 = scmp.eq.s32.totalorder %s25, 1
      %p158 = por %p156, %p157
      %p160 = scmp.ne.s32.totalorder %s143, %s159
      %p161 = scmp.eq.s32.totalorder %s25, 0
      %p162 = por %p160, %p161
      %p163 = scmp.le.s32.totalorder 1, %s19
      %p164 = scmp.lt.s32.totalorder %s19, 3
      %p165 = pnand %p163, %p164
      %p166 = pneg %p165
      // Predicated region
      $region9: #{tpu_custom_call.1} parent=5 // pred_check
        _
      $region10: #{tpu_custom_call.1} parent=5 // pred_check_branch
        %168 = sbr.rel (%p165) target = $region12
      $region11: #{tpu_custom_call.1} parent=5 // pred_region
        %s169 = ssub.s32 %s19, 1
        // Predicated region
        $region13: #{tpu_custom_call.1} parent=11 // pred_check
          %p170 = pneg %p66
        $region14: #{tpu_custom_call.1} parent=11 // pred_check_branch
          %172 = sbr.rel (%p170) target = $region16
        $region15: #{tpu_custom_call.1} parent=11 // pred_region
          %s174 = ssub.s32 256, 256
          %175 = vsyncadd [#allocation6], %s174
          %s176 = sshll.u32 [#allocation5], 4
          %s177 = int_to_ptr.vmem [resolvable:$true] %s176
          %182 = dma.hbm_to_vmem [thread:$0]  %s1, 256, %s177, [#allocation6], 64, 64, 4
        $region16: #{tpu_custom_call.1} parent=11 // pred_fallthru
          _
        // Predicated region
        $region17: #{tpu_custom_call.1} parent=11 // pred_check
          %p183 = pneg %p87
        $region18: #{tpu_custom_call.1} parent=11 // pred_check_branch
          %185 = sbr.rel (%p183) target = $region20
        $region19: #{tpu_custom_call.1} parent=11 // pred_region
          %s187 = ssub.s32 1024, 1024
          %188 = vsyncadd [#allocation6], %s187
          %s189 = sshll.u32 [#allocation7], 4
          %s190 = int_to_ptr.vmem [resolvable:$true] %s189
          %195 = dma.hbm_to_vmem [thread:$0]  %s2, 1024, %s190, [#allocation6], 64, 64, 4
        $region20: #{tpu_custom_call.1} parent=11 // pred_fallthru
          _
        // Predicated region
        $region21: #{tpu_custom_call.1} parent=11 // pred_check
          %p196 = pneg %p108
        $region22: #{tpu_custom_call.1} parent=11 // pred_check_branch
          %198 = sbr.rel (%p196) target = $region24
        $region23: #{tpu_custom_call.1} parent=11 // pred_region
          %s200 = ssub.s32 1024, 1024
          %201 = vsyncadd [#allocation9], %s200
          %s202 = sshll.u32 [#allocation8], 4
          %s203 = int_to_ptr.vmem [resolvable:$true] %s202
          %208 = dma.hbm_to_vmem [thread:$0]  %s3, 1024, %s203, [#allocation9], 64, 64, 4
        $region24: #{tpu_custom_call.1} parent=11 // pred_fallthru
          _
        // Predicated region
        $region25: #{tpu_custom_call.1} parent=11 // pred_check
          %p209 = pneg %p129
        $region26: #{tpu_custom_call.1} parent=11 // pred_check_branch
          %211 = sbr.rel (%p209) target = $region28
        $region27: #{tpu_custom_call.1} parent=11 // pred_region
          _
        $region28: #{tpu_custom_call.1} parent=11 // pred_fallthru
          _
      $region12: #{tpu_custom_call.1} parent=5 // pred_fallthru
        _
      %p212 = scmp.lt.s32.totalorder %s19, 2
      // Predicated region
      $region29: #{tpu_custom_call.1} parent=5 // pred_check
        %p213 = pneg %p212
      $region30: #{tpu_custom_call.1} parent=5 // pred_check_branch
        %215 = sbr.rel (%p213) target = $region32
      $region31: #{tpu_custom_call.1} parent=5 // pred_region
        // Predicated region
        $region33: #{tpu_custom_call.1} parent=31 // pred_check
          %p216 = pneg %p39
        $region34: #{tpu_custom_call.1} parent=31 // pred_check_branch
          %218 = sbr.rel (%p216) target = $region36
        $region35: #{tpu_custom_call.1} parent=31 // pred_region
          %s219 = sand.u32 %s29, 1
          %s220 = scalar_lea.sflag [#allocation3], %s219
          %s221 = sand.u32 %s29, 1
          %s222 = smul.addr %s221, 8
          %s223 = scalar_lea.vmem [#allocation2], %s222
          %s225 = ssub.s32 128, 128
          %226 = vsyncadd %s220, %s225
          %s227 = smul.addr %s19, 128
          %s228 = scalar_lea.hbm %s0, %s227
          %s230 = sshll.u32 %s223, 4
          %s231 = int_to_ptr.vmem [resolvable:$true] %s230
          %233 = dma.hbm_to_vmem [thread:$0]  %s228, 128, %s231, %s220
        $region36: #{tpu_custom_call.1} parent=31 // pred_fallthru
          _
      $region32: #{tpu_custom_call.1} parent=5 // pred_fallthru
        _
      %p234 = scmp.le.s32.totalorder 1, %s19
      %p235 = scmp.lt.s32.totalorder %s19, 3
      %p236 = pnand %p234, %p235
      %p237 = pneg %p236
      // Predicated region
      $region37: #{tpu_custom_call.1} parent=5 // pred_check
        _
      $region38: #{tpu_custom_call.1} parent=5 // pred_check_branch
        %239 = sbr.rel (%p236) target = $region40
      $region39: #{tpu_custom_call.1} parent=5 // pred_region
        %s240 = ssub.s32 %s19, 1
        %s241 = sand.u32 %s32, 1
        %s242 = scalar_lea.sflag [#allocation3], %s241
        %s243 = sand.u32 %s32, 1
        %s244 = smul.addr %s243, 8
        %s245 = scalar_lea.vmem [#allocation2], %s244
        // Predicated region
        $region41: #{tpu_custom_call.1} parent=39 // pred_check
          %p246 = pneg %p45
        $region42: #{tpu_custom_call.1} parent=39 // pred_check_branch
          %248 = sbr.rel (%p246) target = $region44
        $region43: #{tpu_custom_call.1} parent=39 // pred_region
          %249 = dma.done %s242, 128
        $region44: #{tpu_custom_call.1} parent=39 // pred_fallthru
          _
        // Predicated region
        $region45: #{tpu_custom_call.1} parent=39 // pred_check
          %p250 = pneg %p66
        $region46: #{tpu_custom_call.1} parent=39 // pred_check_branch
          %252 = sbr.rel (%p250) target = $region48
        $region47: #{tpu_custom_call.1} parent=39 // pred_region
          %253 = dma.done [#allocation6], 256
        $region48: #{tpu_custom_call.1} parent=39 // pred_fallthru
          _
        // Predicated region
        $region49: #{tpu_custom_call.1} parent=39 // pred_check
          %p254 = pneg %p87
        $region50: #{tpu_custom_call.1} parent=39 // pred_check_branch
          %256 = sbr.rel (%p254) target = $region52
        $region51: #{tpu_custom_call.1} parent=39 // pred_region
          %257 = dma.done [#allocation6], 1024
        $region52: #{tpu_custom_call.1} parent=39 // pred_fallthru
          _
        // Predicated region
        $region53: #{tpu_custom_call.1} parent=39 // pred_check
          %p258 = pneg %p108
        $region54: #{tpu_custom_call.1} parent=39 // pred_check_branch
          %260 = sbr.rel (%p258) target = $region56
        $region55: #{tpu_custom_call.1} parent=39 // pred_region
          %261 = dma.done [#allocation9], 1024
        $region56: #{tpu_custom_call.1} parent=39 // pred_fallthru
          _
        %s262 = sand.u32 %s32, 1
        %s263 = scalar_lea.sflag [#allocation3], %s262
        %s264 = sand.u32 %s32, 1
        %s265 = smul.addr %s264, 8
        %s266 = scalar_lea.vmem [#allocation2], %s265
        %p267 = pneg %p45
        %p268 = pneg %p42
        %p269 = pneg %p66
        %p270 = pneg %p63
        %p271 = pneg %p87
        %p272 = pneg %p84
        %p273 = pneg %p108
        %p274 = pneg %p105
        %p275 = pneg %p129
        %p276 = pneg %p126
        %p277 = pneg %p155
        %p278 = pneg %p152
        %s279 = sand.u32 %s142, 1
        %s280 = scalar_lea.sflag [#allocation4], %s279
        %s281 = sand.u32 %s142, 1
        %s282 = smul.addr %s281, 8
        %s283 = scalar_lea.vmem [#allocation10], %s282
        %v285 = vld [vmem:[%s245] sm:$0xff]
        %v286 = vpack.c.bf16 %v285, %v285
        %v287 = vld [vmem:[#allocation5] sm:$0xf]
        %v288 = vld [vmem:[#allocation5 + $0x4] sm:$0xf]
        %v289 = vld [vmem:[#allocation5 + $0x8] sm:$0xf]
        %v290 = vld [vmem:[#allocation5 + $0xc] sm:$0xf]
        %v291 = vld [vmem:[%s4] sm:$0x1]
        %v292 = vlaneseq
        %v293 = vshrl.u32 %v292, 7
        %v294 = vsub.s32 0, %v293
        %v295 = vrot.slane %v291, %v294
        %v300 = vunpack.c.l.b16 %v287
        %v301 = vunpack.c.l.b16 %v288
        %v302 = vunpack.c.l.b16 %v289
        %v303 = vunpack.c.l.b16 %v290
        %v304 = vpack.c.b16 %v301, %v300
        %v305 = vpack.c.b16 %v303, %v302
        %vm308 = vcmask 261120
        %v310 = vsel %vm308, %v286, 0
        %312 = vmatprep.subr.bf16.mxu0 0
        %313 = vmatpush1.bf16.msra.mxu0 0
        %314 = vmatprep.subr.bf16.mxu0 0
        %315 = vmatpush1.bf16.msra.mxu0 0
        %316 = vmatprep.subr.bf16.mxu0 0
        %317 = vmatpush1.bf16.msra.mxu0 0
        %318 = vmatprep.subr.bf16.mxu0 0
        %319 = vmatpush1.bf16.msra.mxu0 0
        %320 = vmatprep.subr.bf16.mxu0 0
        %321 = vmatpush1.bf16.msra.mxu0 0
        %322 = vmatprep.subr.bf16.mxu0 0
        %323 = vmatpush1.bf16.msra.mxu0 0
        %324 = vmatprep.subr.bf16.mxu0 0
        %325 = vmatpush1.bf16.msra.mxu0 %v305
        %326 = vmatprep.subr.bf16.mxu0 0
        %327 = vmatpush1.bf16.msra.mxu0 %v304
        %328 = vmatprep.subr.bf16.mxu0 0
        %329 = vmatpush2.bf16.msra.mxu0 0
        %330 = vmatprep.subr.bf16.mxu0 0
        %331 = vmatpush2.bf16.msra.mxu0 0
        %332 = vmatprep.subr.bf16.mxu0 0
        %333 = vmatpush2.bf16.msra.mxu0 0
        %334 = vmatprep.subr.bf16.mxu0 0
        %335 = vmatpush2.bf16.msra.mxu0 0
        %336 = vmatprep.subr.bf16.mxu0 0
        %337 = vmatpush2.bf16.msra.mxu0 0
        %338 = vmatprep.subr.bf16.mxu0 0
        %339 = vmatpush2.bf16.msra.mxu0 0
        %340 = vmatprep.subr.bf16.mxu0 0
        %341 = vmatpush2.bf16.msra.mxu0 0
        %342 = vmatprep.subr.bf16.mxu0 0
        %343 = vmatpush2.bf16.msra.mxu0 0
        %344 = vmatprep.mubr.bf16.mxu0 0
        %345 = vmatmul.mubr.bf16.gmra.mxu0 %v310
        %v346 = vpop.f32.mrf.mxu0
        %v347 = vadd.f32 %v295, %v346
        %v348 = vpop.f32.mrf.mxu0
        %v349 = vpop.f32.mrf.mxu0
        %v350 = vpop.f32.mrf.mxu0
        %351 = vdwg.mxu0
        %v352 = vmax.f32 %v347, 0.0
        %v353 = vpack.c.bf16 %v352, %v352
        %v354 = vld [vmem:[#allocation7] sm:$0xf]
        %v355 = vld [vmem:[#allocation7 + $0x4] sm:$0xf]
        %v356 = vld [vmem:[#allocation7 + $0x8] sm:$0xf]
        %v357 = vld [vmem:[#allocation7 + $0xc] sm:$0xf]
        %v358 = vld [vmem:[#allocation7 + $0x10] sm:$0xf]
        %v359 = vld [vmem:[#allocation7 + $0x14] sm:$0xf]
        %v360 = vld [vmem:[#allocation7 + $0x18] sm:$0xf]
        %v361 = vld [vmem:[#allocation7 + $0x1c] sm:$0xf]
        %v362 = vld [vmem:[#allocation7 + $0x20] sm:$0xf]
        %v363 = vld [vmem:[#allocation7 + $0x24] sm:$0xf]
        %v364 = vld [vmem:[#allocation7 + $0x28] sm:$0xf]
        %v365 = vld [vmem:[#allocation7 + $0x2c] sm:$0xf]
        %v366 = vld [vmem:[#allocation7 + $0x30] sm:$0xf]
        %v367 = vld [vmem:[#allocation7 + $0x34] sm:$0xf]
        %v368 = vld [vmem:[#allocation7 + $0x38] sm:$0xf]
        %v369 = vld [vmem:[#allocation7 + $0x3c] sm:$0xf]
        %v370 = vld [vmem:[%s4 + $0x1] sm:$0x1]
        %v371 = vlaneseq
        %v372 = vshrl.u32 %v371, 7
        %v373 = vsub.s32 0, %v372
        %v374 = vrot.slane %v370, %v373
        %v391 = vunpack.c.l.b16 %v354
        %v392 = vunpack.c.l.b16 %v355
        %v393 = vunpack.c.l.b16 %v356
        %v394 = vunpack.c.l.b16 %v357
        %v395 = vunpack.c.l.b16 %v358
        %v396 = vunpack.c.l.b16 %v359
        %v397 = vunpack.c.l.b16 %v360
        %v398 = vunpack.c.l.b16 %v361
        %v399 = vunpack.c.l.b16 %v362
        %v400 = vunpack.c.l.b16 %v363
        %v401 = vunpack.c.l.b16 %v364
        %v402 = vunpack.c.l.b16 %v365
        %v403 = vunpack.c.l.b16 %v366
        %v404 = vunpack.c.l.b16 %v367
        %v405 = vunpack.c.l.b16 %v368
        %v406 = vunpack.c.l.b16 %v369
        %v407 = vpack.c.b16 %v392, %v391
        %v408 = vpack.c.b16 %v394, %v393
        %v409 = vpack.c.b16 %v396, %v395
        %v410 = vpack.c.b16 %v398, %v397
        %v411 = vpack.c.b16 %v400, %v399
        %v412 = vpack.c.b16 %v402, %v401
        %v413 = vpack.c.b16 %v404, %v403
        %v414 = vpack.c.b16 %v406, %v405
        %423 = vmatprep.subr.bf16.mxu0 0
        %424 = vmatpush1.bf16.msra.mxu0 %v414
        %425 = vmatprep.subr.bf16.mxu0 0
        %426 = vmatpush1.bf16.msra.mxu0 %v413
        %427 = vmatprep.subr.bf16.mxu0 0
        %428 = vmatpush1.bf16.msra.mxu0 %v412
        %429 = vmatprep.subr.bf16.mxu0 0
        %430 = vmatpush1.bf16.msra.mxu0 %v411
        %431 = vmatprep.subr.bf16.mxu0 0
        %432 = vmatpush1.bf16.msra.mxu0 %v410
        %433 = vmatprep.subr.bf16.mxu0 0
        %434 = vmatpush1.bf16.msra.mxu0 %v409
        %435 = vmatprep.subr.bf16.mxu0 0
        %436 = vmatpush1.bf16.msra.mxu0 %v408
        %437 = vmatprep.subr.bf16.mxu0 0
        %438 = vmatpush1.bf16.msra.mxu0 %v407
        %439 = vmatprep.subr.bf16.mxu0 0
        %440 = vmatpush2.bf16.msra.mxu0 0
        %441 = vmatprep.subr.bf16.mxu0 0
        %442 = vmatpush2.bf16.msra.mxu0 0
        %443 = vmatprep.subr.bf16.mxu0 0
        %444 = vmatpush2.bf16.msra.mxu0 0
        %445 = vmatprep.subr.bf16.mxu0 0
        %446 = vmatpush2.bf16.msra.mxu0 0
        %447 = vmatprep.subr.bf16.mxu0 0
        %448 = vmatpush2.bf16.msra.mxu0 0
        %449 = vmatprep.subr.bf16.mxu0 0
        %450 = vmatpush2.bf16.msra.mxu0 0
        %451 = vmatprep.subr.bf16.mxu0 0
        %452 = vmatpush2.bf16.msra.mxu0 0
        %453 = vmatprep.subr.bf16.mxu0 0
        %454 = vmatpush2.bf16.msra.mxu0 0
        %455 = vmatprep.mubr.bf16.mxu0 0
        %456 = vmatmul.mubr.bf16.gmra.mxu0 %v353
        %v457 = vpop.f32.mrf.mxu0
        %v458 = vadd.f32 %v374, %v457
        %v459 = vpop.f32.mrf.mxu0
        %v460 = vpop.f32.mrf.mxu0
        %v461 = vpop.f32.mrf.mxu0
        %462 = vdwg.mxu0
        %v463 = vmax.f32 %v458, 0.0
        %v464 = vpack.c.bf16 %v463, %v463
        %v465 = vld [vmem:[#allocation8] sm:$0xf]
        %v466 = vld [vmem:[#allocation8 + $0x4] sm:$0xf]
        %v467 = vld [vmem:[#allocation8 + $0x8] sm:$0xf]
        %v468 = vld [vmem:[#allocation8 + $0xc] sm:$0xf]
        %v469 = vld [vmem:[#allocation8 + $0x10] sm:$0xf]
        %v470 = vld [vmem:[#allocation8 + $0x14] sm:$0xf]
        %v471 = vld [vmem:[#allocation8 + $0x18] sm:$0xf]
        %v472 = vld [vmem:[#allocation8 + $0x1c] sm:$0xf]
        %v473 = vld [vmem:[#allocation8 + $0x20] sm:$0xf]
        %v474 = vld [vmem:[#allocation8 + $0x24] sm:$0xf]
        %v475 = vld [vmem:[#allocation8 + $0x28] sm:$0xf]
        %v476 = vld [vmem:[#allocation8 + $0x2c] sm:$0xf]
        %v477 = vld [vmem:[#allocation8 + $0x30] sm:$0xf]
        %v478 = vld [vmem:[#allocation8 + $0x34] sm:$0xf]
        %v479 = vld [vmem:[#allocation8 + $0x38] sm:$0xf]
        %v480 = vld [vmem:[#allocation8 + $0x3c] sm:$0xf]
        %v481 = vld [vmem:[%s4 + $0x2] sm:$0x1]
        %v482 = vlaneseq
        %v483 = vshrl.u32 %v482, 7
        %v484 = vsub.s32 0, %v483
        %v485 = vrot.slane %v481, %v484
        %v502 = vunpack.c.l.b16 %v465
        %v503 = vunpack.c.l.b16 %v466
        %v504 = vunpack.c.l.b16 %v467
        %v505 = vunpack.c.l.b16 %v468
        %v506 = vunpack.c.l.b16 %v469
        %v507 = vunpack.c.l.b16 %v470
        %v508 = vunpack.c.l.b16 %v471
        %v509 = vunpack.c.l.b16 %v472
        %v510 = vunpack.c.l.b16 %v473
        %v511 = vunpack.c.l.b16 %v474
        %v512 = vunpack.c.l.b16 %v475
        %v513 = vunpack.c.l.b16 %v476
        %v514 = vunpack.c.l.b16 %v477
        %v515 = vunpack.c.l.b16 %v478
        %v516 = vunpack.c.l.b16 %v479
        %v517 = vunpack.c.l.b16 %v480
        %v518 = vpack.c.b16 %v503, %v502
        %v519 = vpack.c.b16 %v505, %v504
        %v520 = vpack.c.b16 %v507, %v506
        %v521 = vpack.c.b16 %v509, %v508
        %v522 = vpack.c.b16 %v511, %v510
        %v523 = vpack.c.b16 %v513, %v512
        %v524 = vpack.c.b16 %v515, %v514
        %v525 = vpack.c.b16 %v517, %v516
        %534 = vmatprep.subr.bf16.mxu0 0
        %535 = vmatpush1.bf16.msra.mxu0 %v525
        %536 = vmatprep.subr.bf16.mxu0 0
        %537 = vmatpush1.bf16.msra.mxu0 %v524
        %538 = vmatprep.subr.bf16.mxu0 0
        %539 = vmatpush1.bf16.msra.mxu0 %v523
        %540 = vmatprep.subr.bf16.mxu0 0
        %541 = vmatpush1.bf16.msra.mxu0 %v522
        %542 = vmatprep.subr.bf16.mxu0 0
        %543 = vmatpush1.bf16.msra.mxu0 %v521
        %544 = vmatprep.subr.bf16.mxu0 0
        %545 = vmatpush1.bf16.msra.mxu0 %v520
        %546 = vmatprep.subr.bf16.mxu0 0
        %547 = vmatpush1.bf16.msra.mxu0 %v519
        %548 = vmatprep.subr.bf16.mxu0 0
        %549 = vmatpush1.bf16.msra.mxu0 %v518
        %550 = vmatprep.subr.bf16.mxu0 0
        %551 = vmatpush2.bf16.msra.mxu0 0
        %552 = vmatprep.subr.bf16.mxu0 0
        %553 = vmatpush2.bf16.msra.mxu0 0
        %554 = vmatprep.subr.bf16.mxu0 0
        %555 = vmatpush2.bf16.msra.mxu0 0
        %556 = vmatprep.subr.bf16.mxu0 0
        %557 = vmatpush2.bf16.msra.mxu0 0
        %558 = vmatprep.subr.bf16.mxu0 0
        %559 = vmatpush2.bf16.msra.mxu0 0
        %560 = vmatprep.subr.bf16.mxu0 0
        %561 = vmatpush2.bf16.msra.mxu0 0
        %562 = vmatprep.subr.bf16.mxu0 0
        %563 = vmatpush2.bf16.msra.mxu0 0
        %564 = vmatprep.subr.bf16.mxu0 0
        %565 = vmatpush2.bf16.msra.mxu0 0
        %566 = vmatprep.mubr.bf16.mxu0 0
        %567 = vmatmul.mubr.bf16.gmra.mxu0 %v464
        %v568 = vpop.f32.mrf.mxu0
        %v569 = vadd.f32 %v485, %v568
        %v570 = vpop.f32.mrf.mxu0
        %v571 = vpop.f32.mrf.mxu0
        %v572 = vpop.f32.mrf.mxu0
        %573 = vdwg.mxu0
        %574 = vst [vmem:[%s283] sm:$0xff] %v569
        %s575 = sand.u32 %s142, 1
        %s576 = scalar_lea.sflag [#allocation4], %s575
        %s577 = sand.u32 %s142, 1
        %s578 = smul.addr %s577, 8
        %s579 = scalar_lea.vmem [#allocation10], %s578
        // Predicated region
        $region57: #{tpu_custom_call.1} parent=39 // pred_check
          %p580 = pneg %p152
        $region58: #{tpu_custom_call.1} parent=39 // pred_check_branch
          %582 = sbr.rel (%p580) target = $region60
        $region59: #{tpu_custom_call.1} parent=39 // pred_region
          %s584 = ssub.s32 128, 128
          %585 = vsyncadd %s576, %s584
          %s586 = smul.addr %s24, 128
          %s587 = scalar_lea.hbm %s5, %s586
          %s589 = sshll.u32 %s579, 4
          %s590 = int_to_ptr.vmem [resolvable:$true] %s589
          %592 = dma.vmem_to_hbm [thread:$0]  %s590, 128, %s587, %s576
        $region60: #{tpu_custom_call.1} parent=39 // pred_fallthru
          _
      $region40: #{tpu_custom_call.1} parent=5 // pred_fallthru
        _
      %p593 = scmp.le.s32.totalorder 2, %s19
      // Predicated region
      $region61: #{tpu_custom_call.1} parent=5 // pred_check
        %p594 = pneg %p593
      $region62: #{tpu_custom_call.1} parent=5 // pred_check_branch
        %596 = sbr.rel (%p594) target = $region64
      $region63: #{tpu_custom_call.1} parent=5 // pred_region
        %s597 = ssub.s32 %s19, 2
        // Predicated region
        $region65: #{tpu_custom_call.1} parent=63 // pred_check
          %p598 = pneg %p158
        $region66: #{tpu_custom_call.1} parent=63 // pred_check_branch
          %600 = sbr.rel (%p598) target = $region68
        $region67: #{tpu_custom_call.1} parent=63 // pred_region
          %s601 = sand.u32 %s143, 1
          %s602 = scalar_lea.sflag [#allocation4], %s601
          %s603 = sand.u32 %s143, 1
          %s604 = smul.addr %s603, 8
          %s605 = scalar_lea.vmem [#allocation10], %s604
          %606 = dma.done %s602, 128
        $region68: #{tpu_custom_call.1} parent=63 // pred_fallthru
          _
      $region64: #{tpu_custom_call.1} parent=5 // pred_fallthru
        _
    $region6: #{tpu_custom_call.1} parent=1 // loop_footer
      %s23 = sadd.s32 1, %s19
    $region7: #{tpu_custom_call.1} parent=1 // loop_footer_branch
      %18 = sbr.rel target = $region3
    $region8: #{tpu_custom_call.1} parent=1 // loop_exit
      _
    %607 = vsyncpa [#allocation3], 1
    %s608 = scalar_lea.sflag [#allocation3], 1
    %609 = vsyncpa %s608, 1
    %610 = vsyncpa [#allocation6], 1
    %611 = vsyncpa [#allocation9], 1
    %612 = vsyncpa [#allocation4], 1
    %s613 = scalar_lea.sflag [#allocation4], 1
    %614 = vsyncpa %s613, 1

// kernel: tpu_custom_call.1
$region0: #{tpu_custom_call.1}
  #allocation0 [shape = 'u32[]', space=smem, size = 0x4, offset = 0x4, fixed_abs, tag = 'smem constant byte address 0x4 - core index']
  #allocation1 [shape = 'u32[144,128]{1,0:T(1,128)}', space=vmem, size = 0x12000, scoped, tag = 'internal scratch']
  %s0 = inlined_call_operand.hbm [shape: f32[16,32], index: 0, kind: input, shape index: {}]
  %s1 = inlined_call_operand.hbm [shape: bf16[32,128], index: 1, kind: input, shape index: {}]
  %s2 = inlined_call_operand.hbm [shape: bf16[128,128], index: 2, kind: input, shape index: {}]
  %s3 = inlined_call_operand.hbm [shape: bf16[128,128], index: 3, kind: input, shape index: {}]
  %s4 = inlined_call_operand.vmem [shape: f32[3,128], index: 4, kind: input, shape index: {}]
  %s5 = inlined_call_operand.hbm [shape: f32[16,128], index: 5, kind: output, shape index: {}]
  %s6 = sld [smem:[#allocation0]]
  $region69: #{tpu_custom_call.1} parent=0
    _
  %s8 = ssub.s32 1, %s6
  %s9 = scalar_select 0, %s8, %s6
  $region1: #{tpu_custom_call.1} parent=0
    #allocation2 [shape = 'u8[8192]{0}', space=vmem, size = 0x2000, scoped, tag = 'input window, operand 0']
    #allocation3 [shape = 's32[2]{0}', space=sflag, size = 0x8, scoped, tag = 'scoped memory for tpu_custom_call.1']
    #allocation4 [shape = 's32[2]{0}', space=sflag, size = 0x8, scoped, tag = 'scoped memory for tpu_custom_call.1']
    #allocation5 [shape = 'u8[8192]{0}', space=vmem, size = 0x2000, scoped, tag = 'input window, operand 1, single buffered']
    #allocation6 [shape = 's32[1]{0}', space=sflag, size = 0x4, scoped, tag = 'scoped memory for tpu_custom_call.1']
    #allocation7 [shape = 'u8[32768]{0}', space=vmem, size = 0x8000, scoped, tag = 'input window, operand 2, single buffered']
    #allocation8 [shape = 'u8[32768]{0}', space=vmem, size = 0x8000, scoped, tag = 'input window, operand 3, single buffered']
    #allocation9 [shape = 's32[1]{0}', space=sflag, size = 0x4, scoped, tag = 'scoped memory for tpu_custom_call.1']
    #allocation10 [shape = 'u8[8192]{0}', space=vmem, size = 0x2000, scoped, tag = 'output window, operand 0']
    %10 = vsyncpa [#allocation3], 0
    %s11 = scalar_lea.sflag [#allocation3], 1
    %12 = vsyncpa %s11, 0
    %13 = vsyncpa [#allocation6], 0
    %14 = vsyncpa [#allocation9], 0
    %15 = vsyncpa [#allocation4], 0
    %s16 = scalar_lea.sflag [#allocation4], 1
    %17 = vsyncpa %s16, 0
    loop: start=0, step=1, limit=4
    $region2: #{tpu_custom_call.1} parent=1 // loop_pre_header
      _
    $region3: #{tpu_custom_call.1} parent=1 // loop_header
      %s19 = sphi 0, %s23
      %p20 = scmp.ge.s32.totalorder %s19, 4
      %s29 = sphi 0, %s31
      %s32 = sphi 0, %s29
      %s33 = sphi 0, %s32
      %s49 = sphi 0, %s33
      %s53 = sphi 0, %s53
      %s55 = sphi 0, %s53
      %s56 = sphi 0, %s55
      %s70 = sphi 0, %s56
      %s74 = sphi 0, %s74
      %s76 = sphi 0, %s74
      %s77 = sphi 0, %s76
      %s91 = sphi 0, %s77
      %s95 = sphi 0, %s95
      %s97 = sphi 0, %s95
      %s98 = sphi 0, %s97
      %s112 = sphi 0, %s98
      %s116 = sphi 0, %s116
      %s118 = sphi 0, %s116
      %s119 = sphi 0, %s118
      %s133 = sphi 0, %s119
      %s139 = sphi 0, %s141
      %s142 = sphi 0, %s139
      %s143 = sphi 0, %s142
      %s159 = sphi 0, %s143
    $region4: #{tpu_custom_call.1} parent=1 // loop_header_branch
      %22 = sbr.rel (%p20) target = $region8
    $region5: #{tpu_custom_call.1} parent=1 // loop_body
      %s24 = ssub.s32 %s19, 1
      %s25 = ssub.s32 %s19, 2
      %s26 = sadd.s32 %s19, 1
      %s27 = ssub.s32 %s19, %s26
      %p28 = scmp.eq.s32.totalorder %s27, 0
      %s30 = sadd.s32 %s29, 1
      %s31 = scalar_select %p28, %s29, %s30
      %p34 = pneg %p28
      %p35 = scmp.eq.s32.totalorder %s19, 1
      %p36 = por %p34, %p35
      %p37 = scmp.ne.s32.totalorder %s29, %s32
      %p38 = scmp.eq.s32.totalorder %s19, 0
      %p39 = por %p37, %p38
      %p40 = scmp.ne.s32.totalorder %s29, %s32
      %p41 = scmp.eq.s32.totalorder %s24, 1
      %p42 = por %p40, %p41
      %p43 = scmp.ne.s32.totalorder %s32, %s33
      %p44 = scmp.eq.s32.totalorder %s24, 0
      %p45 = por %p43, %p44
      %p46 = scmp.ne.s32.totalorder %s32, %s33
      %p47 = scmp.eq.s32.totalorder %s25, 1
      %p48 = por %p46, %p47
      %p50 = scmp.ne.s32.totalorder %s33, %s49
      %p51 = scmp.eq.s32.totalorder %s25, 0
      %p52 = por %p50, %p51
      %s54 = sadd.s32 %s53, 1
      %p57 = scmp.eq.s32.totalorder %s19, 1
      %p58 = scmp.ne.s32.totalorder %s53, %s55
      %p59 = scmp.eq.s32.totalorder %s19, 0
      %p60 = por %p58, %p59
      %p61 = scmp.ne.s32.totalorder %s53, %s55
      %p62 = scmp.eq.s32.totalorder %s24, 1
      %p63 = por %p61, %p62
      %p64 = scmp.ne.s32.totalorder %s55, %s56
      %p65 = scmp.eq.s32.totalorder %s24, 0
      %p66 = por %p64, %p65
      %p67 = scmp.ne.s32.totalorder %s55, %s56
      %p68 = scmp.eq.s32.totalorder %s25, 1
      %p69 = por %p67, %p68
      %p71 = scmp.ne.s32.totalorder %s56, %s70
      %p72 = scmp.eq.s32.totalorder %s25, 0
      %p73 = por %p71, %p72
      %s75 = sadd.s32 %s74, 1
      %p78 = scmp.eq.s32.totalorder %s19, 1
      %p79 = scmp.ne.s32.totalorder %s74, %s76
      %p80 = scmp.eq.s32.totalorder %s19, 0
      %p81 = por %p79, %p80
      %p82 = scmp.ne.s32.totalorder %s74, %s76
      %p83 = scmp.eq.s32.totalorder %s24, 1
      %p84 = por %p82, %p83
      %p85 = scmp.ne.s32.totalorder %s76, %s77
      %p86 = scmp.eq.s32.totalorder %s24, 0
      %p87 = por %p85, %p86
      %p88 = scmp.ne.s32.totalorder %s76, %s77
      %p89 = scmp.eq.s32.totalorder %s25, 1
      %p90 = por %p88, %p89
      %p92 = scmp.ne.s32.totalorder %s77, %s91
      %p93 = scmp.eq.s32.totalorder %s25, 0
      %p94 = por %p92, %p93
      %s96 = sadd.s32 %s95, 1
      %p99 = scmp.eq.s32.totalorder %s19, 1
      %p100 = scmp.ne.s32.totalorder %s95, %s97
      %p101 = scmp.eq.s32.totalorder %s19, 0
      %p102 = por %p100, %p101
      %p103 = scmp.ne.s32.totalorder %s95, %s97
      %p104 = scmp.eq.s32.totalorder %s24, 1
      %p105 = por %p103, %p104
      %p106 = scmp.ne.s32.totalorder %s97, %s98
      %p107 = scmp.eq.s32.totalorder %s24, 0
      %p108 = por %p106, %p107
      %p109 = scmp.ne.s32.totalorder %s97, %s98
      %p110 = scmp.eq.s32.totalorder %s25, 1
      %p111 = por %p109, %p110
      %p113 = scmp.ne.s32.totalorder %s98, %s112
      %p114 = scmp.eq.s32.totalorder %s25, 0
      %p115 = por %p113, %p114
      %s117 = sadd.s32 %s116, 1
      %p120 = scmp.eq.s32.totalorder %s19, 1
      %p121 = scmp.ne.s32.totalorder %s116, %s118
      %p122 = scmp.eq.s32.totalorder %s19, 0
      %p123 = por %p121, %p122
      %p124 = scmp.ne.s32.totalorder %s116, %s118
      %p125 = scmp.eq.s32.totalorder %s24, 1
      %p126 = por %p124, %p125
      %p127 = scmp.ne.s32.totalorder %s118, %s119
      %p128 = scmp.eq.s32.totalorder %s24, 0
      %p129 = por %p127, %p128
      %p130 = scmp.ne.s32.totalorder %s118, %s119
      %p131 = scmp.eq.s32.totalorder %s25, 1
      %p132 = por %p130, %p131
      %p134 = scmp.ne.s32.totalorder %s119, %s133
      %p135 = scmp.eq.s32.totalorder %s25, 0
      %p136 = por %p134, %p135
      %s137 = ssub.s32 %s19, %s26
      %p138 = scmp.eq.s32.totalorder %s137, 0
      %s140 = sadd.s32 %s139, 1
      %s141 = scalar_select %p138, %s139, %s140
      %p144 = pneg %p138
      %p145 = scmp.eq.s32.totalorder %s19, 1
      %p146 = por %p144, %p145
      %p147 = scmp.ne.s32.totalorder %s139, %s142
      %p148 = scmp.eq.s32.totalorder %s19, 0
      %p149 = por %p147, %p148
      %p150 = scmp.ne.s32.totalorder %s139, %s142
      %p151 = scmp.eq.s32.totalorder %s24, 1
      %p152 = por %p150, %p151
      %p153 = scmp.ne.s32.totalorder %s142, %s143
      %p154 = scmp.eq.s32.totalorder %s24, 0
      %p155 = por %p153, %p154
      %p156 = scmp.ne.s32.totalorder %s142, %s143
      %p157 = scmp.eq.s32.totalorder %s25, 1
      %p158 = por %p156, %p157
      %p160 = scmp.ne.s32.totalorder %s143, %s159
      %p161 = scmp.eq.s32.totalorder %s25, 0
      %p162 = por %p160, %p161
      %p163 = scmp.le.s32.totalorder 1, %s19
      %p164 = scmp.lt.s32.totalorder %s19, 3
      %p165 = pnand %p163, %p164
      %p166 = pneg %p165
      // Predicated region
      $region9: #{tpu_custom_call.1} parent=5 // pred_check
        _
      $region10: #{tpu_custom_call.1} parent=5 // pred_check_branch
        %168 = sbr.rel (%p165) target = $region12
      $region11: #{tpu_custom_call.1} parent=5 // pred_region
        %s169 = ssub.s32 %s19, 1
        // Predicated region
        $region13: #{tpu_custom_call.1} parent=11 // pred_check
          %p170 = pneg %p66
        $region14: #{tpu_custom_call.1} parent=11 // pred_check_branch
          %172 = sbr.rel (%p170) target = $region16
        $region15: #{tpu_custom_call.1} parent=11 // pred_region
          %s174 = ssub.s32 256, 256
          %175 = vsyncadd [#allocation6], %s174
          %s176 = sshll.u32 [#allocation5], 4
          %s177 = int_to_ptr.vmem [resolvable:$true] %s176
          %182 = dma.hbm_to_vmem [thread:$0]  %s1, 256, %s177, [#allocation6], 64, 64, 4
        $region16: #{tpu_custom_call.1} parent=11 // pred_fallthru
          _
        // Predicated region
        $region17: #{tpu_custom_call.1} parent=11 // pred_check
          %p183 = pneg %p87
        $region18: #{tpu_custom_call.1} parent=11 // pred_check_branch
          %185 = sbr.rel (%p183) target = $region20
        $region19: #{tpu_custom_call.1} parent=11 // pred_region
          %s187 = ssub.s32 1024, 1024
          %188 = vsyncadd [#allocation6], %s187
          %s189 = sshll.u32 [#allocation7], 4
          %s190 = int_to_ptr.vmem [resolvable:$true] %s189
          %195 = dma.hbm_to_vmem [thread:$0]  %s2, 1024, %s190, [#allocation6], 64, 64, 4
        $region20: #{tpu_custom_call.1} parent=11 // pred_fallthru
          _
        // Predicated region
        $region21: #{tpu_custom_call.1} parent=11 // pred_check
          %p196 = pneg %p108
        $region22: #{tpu_custom_call.1} parent=11 // pred_check_branch
          %198 = sbr.rel (%p196) target = $region24
        $region23: #{tpu_custom_call.1} parent=11 // pred_region
          %s200 = ssub.s32 1024, 1024
          %201 = vsyncadd [#allocation9], %s200
          %s202 = sshll.u32 [#allocation8], 4
          %s203 = int_to_ptr.vmem [resolvable:$true] %s202
          %208 = dma.hbm_to_vmem [thread:$0]  %s3, 1024, %s203, [#allocation9], 64, 64, 4
        $region24: #{tpu_custom_call.1} parent=11 // pred_fallthru
          _
        // Predicated region
        $region25: #{tpu_custom_call.1} parent=11 // pred_check
          %p209 = pneg %p129
        $region26: #{tpu_custom_call.1} parent=11 // pred_check_branch
          %211 = sbr.rel (%p209) target = $region28
        $region27: #{tpu_custom_call.1} parent=11 // pred_region
          _
        $region28: #{tpu_custom_call.1} parent=11 // pred_fallthru
          _
      $region12: #{tpu_custom_call.1} parent=5 // pred_fallthru
        _
      %p212 = scmp.lt.s32.totalorder %s19, 2
      // Predicated region
      $region29: #{tpu_custom_call.1} parent=5 // pred_check
        %p213 = pneg %p212
      $region30: #{tpu_custom_call.1} parent=5 // pred_check_branch
        %215 = sbr.rel (%p213) target = $region32
      $region31: #{tpu_custom_call.1} parent=5 // pred_region
        // Predicated region
        $region33: #{tpu_custom_call.1} parent=31 // pred_check
          %p216 = pneg %p39
        $region34: #{tpu_custom_call.1} parent=31 // pred_check_branch
          %218 = sbr.rel (%p216) target = $region36
        $region35: #{tpu_custom_call.1} parent=31 // pred_region
          %s219 = sand.u32 %s29, 1
          %s220 = scalar_lea.sflag [#allocation3], %s219
          %s221 = sand.u32 %s29, 1
          %s222 = smul.addr %s221, 8
          %s223 = scalar_lea.vmem [#allocation2], %s222
          %s225 = ssub.s32 128, 128
          %226 = vsyncadd %s220, %s225
          %s227 = smul.addr %s19, 128
          %s228 = scalar_lea.hbm %s0, %s227
          %s230 = sshll.u32 %s223, 4
          %s231 = int_to_ptr.vmem [resolvable:$true] %s230
          %233 = dma.hbm_to_vmem [thread:$0]  %s228, 128, %s231, %s220
        $region36: #{tpu_custom_call.1} parent=31 // pred_fallthru
          _
      $region32: #{tpu_custom_call.1} parent=5 // pred_fallthru
        _
      %p234 = scmp.le.s32.totalorder 1, %s19
      %p235 = scmp.lt.s32.totalorder %s19, 3
      %p236 = pnand %p234, %p235
      %p237 = pneg %p236
      // Predicated region
      $region37: #{tpu_custom_call.1} parent=5 // pred_check
        _
      $region38: #{tpu_custom_call.1} parent=5 // pred_check_branch
        %239 = sbr.rel (%p236) target = $region40
      $region39: #{tpu_custom_call.1} parent=5 // pred_region
        %s240 = ssub.s32 %s19, 1
        %s241 = sand.u32 %s32, 1
        %s242 = scalar_lea.sflag [#allocation3], %s241
        %s243 = sand.u32 %s32, 1
        %s244 = smul.addr %s243, 8
        %s245 = scalar_lea.vmem [#allocation2], %s244
        // Predicated region
        $region41: #{tpu_custom_call.1} parent=39 // pred_check
          %p246 = pneg %p45
        $region42: #{tpu_custom_call.1} parent=39 // pred_check_branch
          %248 = sbr.rel (%p246) target = $region44
        $region43: #{tpu_custom_call.1} parent=39 // pred_region
          %249 = dma.done %s242, 128
        $region44: #{tpu_custom_call.1} parent=39 // pred_fallthru
          _
        // Predicated region
        $region45: #{tpu_custom_call.1} parent=39 // pred_check
          %p250 = pneg %p66
        $region46: #{tpu_custom_call.1} parent=39 // pred_check_branch
          %252 = sbr.rel (%p250) target = $region48
        $region47: #{tpu_custom_call.1} parent=39 // pred_region
          %253 = dma.done [#allocation6], 256
        $region48: #{tpu_custom_call.1} parent=39 // pred_fallthru
          _
        // Predicated region
        $region49: #{tpu_custom_call.1} parent=39 // pred_check
          %p254 = pneg %p87
        $region50: #{tpu_custom_call.1} parent=39 // pred_check_branch
          %256 = sbr.rel (%p254) target = $region52
        $region51: #{tpu_custom_call.1} parent=39 // pred_region
          %257 = dma.done [#allocation6], 1024
        $region52: #{tpu_custom_call.1} parent=39 // pred_fallthru
          _
        // Predicated region
        $region53: #{tpu_custom_call.1} parent=39 // pred_check
          %p258 = pneg %p108
        $region54: #{tpu_custom_call.1} parent=39 // pred_check_branch
          %260 = sbr.rel (%p258) target = $region56
        $region55: #{tpu_custom_call.1} parent=39 // pred_region
          %261 = dma.done [#allocation9], 1024
        $region56: #{tpu_custom_call.1} parent=39 // pred_fallthru
          _
        %s262 = sand.u32 %s32, 1
        %s263 = scalar_lea.sflag [#allocation3], %s262
        %s264 = sand.u32 %s32, 1
        %s265 = smul.addr %s264, 8
        %s266 = scalar_lea.vmem [#allocation2], %s265
        %p267 = pneg %p45
        %p268 = pneg %p42
        %p269 = pneg %p66
        %p270 = pneg %p63
        %p271 = pneg %p87
        %p272 = pneg %p84
        %p273 = pneg %p108
        %p274 = pneg %p105
        %p275 = pneg %p129
        %p276 = pneg %p126
        %p277 = pneg %p155
        %p278 = pneg %p152
        %s279 = sand.u32 %s142, 1
        %s280 = scalar_lea.sflag [#allocation4], %s279
        %s281 = sand.u32 %s142, 1
        %s282 = smul.addr %s281, 8
        %s283 = scalar_lea.vmem [#allocation10], %s282
        %v285 = vld [vmem:[%s245] sm:$0xff]
        %v286 = vpack.c.bf16 %v285, %v285
        %v287 = vld [vmem:[#allocation5] sm:$0xf]
        %v288 = vld [vmem:[#allocation5 + $0x4] sm:$0xf]
        %v289 = vld [vmem:[#allocation5 + $0x8] sm:$0xf]
        %v290 = vld [vmem:[#allocation5 + $0xc] sm:$0xf]
        %v291 = vld [vmem:[%s4] sm:$0x1]
        %v292 = vlaneseq
        %v293 = vshrl.u32 %v292, 7
        %v294 = vsub.s32 0, %v293
        %v295 = vrot.slane %v291, %v294
        %v300 = vunpack.c.l.b16 %v287
        %v301 = vunpack.c.l.b16 %v288
        %v302 = vunpack.c.l.b16 %v289
        %v303 = vunpack.c.l.b16 %v290
        %v304 = vpack.c.b16 %v301, %v300
        %v305 = vpack.c.b16 %v303, %v302
        %vm308 = vcmask 261120
        %v310 = vsel %vm308, %v286, 0
        %312 = vmatprep.subr.bf16.mxu0 0
        %313 = vmatpush1.bf16.msra.mxu0 0
        %314 = vmatprep.subr.bf16.mxu0 0
        %315 = vmatpush1.bf16.msra.mxu0 0
        %316 = vmatprep.subr.bf16.mxu0 0
        %317 = vmatpush1.bf16.msra.mxu0 0
        %318 = vmatprep.subr.bf16.mxu0 0
        %319 = vmatpush1.bf16.msra.mxu0 0
        %320 = vmatprep.subr.bf16.mxu0 0
        %321 = vmatpush1.bf16.msra.mxu0 0
        %322 = vmatprep.subr.bf16.mxu0 0
        %323 = vmatpush1.bf16.msra.mxu0 0
        %324 = vmatprep.subr.bf16.mxu0 0
        %325 = vmatpush1.bf16.msra.mxu0 %v305
        %326 = vmatprep.subr.bf16.mxu0 0
        %327 = vmatpush1.bf16.msra.mxu0 %v304
        %328 = vmatprep.subr.bf16.mxu0 0
        %329 = vmatpush2.bf16.msra.mxu0 0
        %330 = vmatprep.subr.bf16.mxu0 0
        %331 = vmatpush2.bf16.msra.mxu0 0
        %332 = vmatprep.subr.bf16.mxu0 0
        %333 = vmatpush2.bf16.msra.mxu0 0
        %334 = vmatprep.subr.bf16.mxu0 0
        %335 = vmatpush2.bf16.msra.mxu0 0
        %336 = vmatprep.subr.bf16.mxu0 0
        %337 = vmatpush2.bf16.msra.mxu0 0
        %338 = vmatprep.subr.bf16.mxu0 0
        %339 = vmatpush2.bf16.msra.mxu0 0
        %340 = vmatprep.subr.bf16.mxu0 0
        %341 = vmatpush2.bf16.msra.mxu0 0
        %342 = vmatprep.subr.bf16.mxu0 0
        %343 = vmatpush2.bf16.msra.mxu0 0
        %344 = vmatprep.mubr.bf16.mxu0 0
        %345 = vmatmul.mubr.bf16.gmra.mxu0 %v310
        %v346 = vpop.f32.mrf.mxu0
        %v347 = vadd.f32 %v295, %v346
        %v348 = vpop.f32.mrf.mxu0
        %v349 = vpop.f32.mrf.mxu0
        %v350 = vpop.f32.mrf.mxu0
        %351 = vdwg.mxu0
        %v352 = vmax.f32 %v347, 0.0
        %v353 = vpack.c.bf16 %v352, %v352
        %v354 = vld [vmem:[#allocation7] sm:$0xf]
        %v355 = vld [vmem:[#allocation7 + $0x4] sm:$0xf]
        %v356 = vld [vmem:[#allocation7 + $0x8] sm:$0xf]
        %v357 = vld [vmem:[#allocation7 + $0xc] sm:$0xf]
        %v358 = vld [vmem:[#allocation7 + $0x10] sm:$0xf]
        %v359 = vld [vmem:[#allocation7 + $0x14] sm:$0xf]
        %v360 = vld [vmem:[#allocation7 + $0x18] sm:$0xf]
        %v361 = vld [vmem:[#allocation7 + $0x1c] sm:$0xf]
        %v362 = vld [vmem:[#allocation7 + $0x20] sm:$0xf]
        %v363 = vld [vmem:[#allocation7 + $0x24] sm:$0xf]
        %v364 = vld [vmem:[#allocation7 + $0x28] sm:$0xf]
        %v365 = vld [vmem:[#allocation7 + $0x2c] sm:$0xf]
        %v366 = vld [vmem:[#allocation7 + $0x30] sm:$0xf]
        %v367 = vld [vmem:[#allocation7 + $0x34] sm:$0xf]
        %v368 = vld [vmem:[#allocation7 + $0x38] sm:$0xf]
        %v369 = vld [vmem:[#allocation7 + $0x3c] sm:$0xf]
        %v370 = vld [vmem:[%s4 + $0x1] sm:$0x1]
        %v371 = vlaneseq
        %v372 = vshrl.u32 %v371, 7
        %v373 = vsub.s32 0, %v372
        %v374 = vrot.slane %v370, %v373
        %v391 = vunpack.c.l.b16 %v354
        %v392 = vunpack.c.l.b16 %v355
        %v393 = vunpack.c.l.b16 %v356
        %v394 = vunpack.c.l.b16 %v357
        %v395 = vunpack.c.l.b16 %v358
        %v396 = vunpack.c.l.b16 %v359
        %v397 = vunpack.c.l.b16 %v360
        %v398 = vunpack.c.l.b16 %v361
        %v399 = vunpack.c.l.b16 %v362
        %v400 = vunpack.c.l.b16 %v363
        %v401 = vunpack.c.l.b16 %v364
        %v402 = vunpack.c.l.b16 %v365
        %v403 = vunpack.c.l.b16 %v366
        %v404 = vunpack.c.l.b16 %v367
        %v405 = vunpack.c.l.b16 %v368
        %v406 = vunpack.c.l.b16 %v369
        %v407 = vpack.c.b16 %v392, %v391
        %v408 = vpack.c.b16 %v394, %v393
        %v409 = vpack.c.b16 %v396, %v395
        %v410 = vpack.c.b16 %v398, %v397
        %v411 = vpack.c.b16 %v400, %v399
        %v412 = vpack.c.b16 %v402, %v401
        %v413 = vpack.c.b16 %v404, %v403
        %v414 = vpack.c.b16 %v406, %v405
        %423 = vmatprep.subr.bf16.mxu0 0
        %424 = vmatpush1.bf16.msra.mxu0 %v414
        %425 = vmatprep.subr.bf16.mxu0 0
        %426 = vmatpush1.bf16.msra.mxu0 %v413
        %427 = vmatprep.subr.bf16.mxu0 0
        %428 = vmatpush1.bf16.msra.mxu0 %v412
        %429 = vmatprep.subr.bf16.mxu0 0
        %430 = vmatpush1.bf16.msra.mxu0 %v411
        %431 = vmatprep.subr.bf16.mxu0 0
        %432 = vmatpush1.bf16.msra.mxu0 %v410
        %433 = vmatprep.subr.bf16.mxu0 0
        %434 = vmatpush1.bf16.msra.mxu0 %v409
        %435 = vmatprep.subr.bf16.mxu0 0
        %436 = vmatpush1.bf16.msra.mxu0 %v408
        %437 = vmatprep.subr.bf16.mxu0 0
        %438 = vmatpush1.bf16.msra.mxu0 %v407
        %439 = vmatprep.subr.bf16.mxu0 0
        %440 = vmatpush2.bf16.msra.mxu0 0
        %441 = vmatprep.subr.bf16.mxu0 0
        %442 = vmatpush2.bf16.msra.mxu0 0
        %443 = vmatprep.subr.bf16.mxu0 0
        %444 = vmatpush2.bf16.msra.mxu0 0
        %445 = vmatprep.subr.bf16.mxu0 0
        %446 = vmatpush2.bf16.msra.mxu0 0
        %447 = vmatprep.subr.bf16.mxu0 0
        %448 = vmatpush2.bf16.msra.mxu0 0
        %449 = vmatprep.subr.bf16.mxu0 0
        %450 = vmatpush2.bf16.msra.mxu0 0
        %451 = vmatprep.subr.bf16.mxu0 0
        %452 = vmatpush2.bf16.msra.mxu0 0
        %453 = vmatprep.subr.bf16.mxu0 0
        %454 = vmatpush2.bf16.msra.mxu0 0
        %455 = vmatprep.mubr.bf16.mxu0 0
        %456 = vmatmul.mubr.bf16.gmra.mxu0 %v353
        %v457 = vpop.f32.mrf.mxu0
        %v458 = vadd.f32 %v374, %v457
        %v459 = vpop.f32.mrf.mxu0
        %v460 = vpop.f32.mrf.mxu0
        %v461 = vpop.f32.mrf.mxu0
        %462 = vdwg.mxu0
        %v463 = vmax.f32 %v458, 0.0
        %v464 = vpack.c.bf16 %v463, %v463
        %v465 = vld [vmem:[#allocation8] sm:$0xf]
        %v466 = vld [vmem:[#allocation8 + $0x4] sm:$0xf]
        %v467 = vld [vmem:[#allocation8 + $0x8] sm:$0xf]
        %v468 = vld [vmem:[#allocation8 + $0xc] sm:$0xf]
        %v469 = vld [vmem:[#allocation8 + $0x10] sm:$0xf]
        %v470 = vld [vmem:[#allocation8 + $0x14] sm:$0xf]
        %v471 = vld [vmem:[#allocation8 + $0x18] sm:$0xf]
        %v472 = vld [vmem:[#allocation8 + $0x1c] sm:$0xf]
        %v473 = vld [vmem:[#allocation8 + $0x20] sm:$0xf]
        %v474 = vld [vmem:[#allocation8 + $0x24] sm:$0xf]
        %v475 = vld [vmem:[#allocation8 + $0x28] sm:$0xf]
        %v476 = vld [vmem:[#allocation8 + $0x2c] sm:$0xf]
        %v477 = vld [vmem:[#allocation8 + $0x30] sm:$0xf]
        %v478 = vld [vmem:[#allocation8 + $0x34] sm:$0xf]
        %v479 = vld [vmem:[#allocation8 + $0x38] sm:$0xf]
        %v480 = vld [vmem:[#allocation8 + $0x3c] sm:$0xf]
        %v481 = vld [vmem:[%s4 + $0x2] sm:$0x1]
        %v482 = vlaneseq
        %v483 = vshrl.u32 %v482, 7
        %v484 = vsub.s32 0, %v483
        %v485 = vrot.slane %v481, %v484
        %v502 = vunpack.c.l.b16 %v465
        %v503 = vunpack.c.l.b16 %v466
        %v504 = vunpack.c.l.b16 %v467
        %v505 = vunpack.c.l.b16 %v468
        %v506 = vunpack.c.l.b16 %v469
        %v507 = vunpack.c.l.b16 %v470
        %v508 = vunpack.c.l.b16 %v471
        %v509 = vunpack.c.l.b16 %v472
        %v510 = vunpack.c.l.b16 %v473
        %v511 = vunpack.c.l.b16 %v474
        %v512 = vunpack.c.l.b16 %v475
        %v513 = vunpack.c.l.b16 %v476
        %v514 = vunpack.c.l.b16 %v477
        %v515 = vunpack.c.l.b16 %v478
        %v516 = vunpack.c.l.b16 %v479
        %v517 = vunpack.c.l.b16 %v480
        %v518 = vpack.c.b16 %v503, %v502
        %v519 = vpack.c.b16 %v505, %v504
        %v520 = vpack.c.b16 %v507, %v506
        %v521 = vpack.c.b16 %v509, %v508
        %v522 = vpack.c.b16 %v511, %v510
        %v523 = vpack.c.b16 %v513, %v512
        %v524 = vpack.c.b16 %v515, %v514
        %v525 = vpack.c.b16 %v517, %v516
        %534 = vmatprep.subr.bf16.mxu0 0
        %535 = vmatpush1.bf16.msra.mxu0 %v525
        %536 = vmatprep.subr.bf16.mxu0 0
        %537 = vmatpush1.bf16.msra.mxu0 %v524
        %538 = vmatprep.subr.bf16.mxu0 0
        %539 = vmatpush1.bf16.msra.mxu0 %v523
        %540 = vmatprep.subr.bf16.mxu0 0
        %541 = vmatpush1.bf16.msra.mxu0 %v522
        %542 = vmatprep.subr.bf16.mxu0 0
        %543 = vmatpush1.bf16.msra.mxu0 %v521
        %544 = vmatprep.subr.bf16.mxu0 0
        %545 = vmatpush1.bf16.msra.mxu0 %v520
        %546 = vmatprep.subr.bf16.mxu0 0
        %547 = vmatpush1.bf16.msra.mxu0 %v519
        %548 = vmatprep.subr.bf16.mxu0 0
        %549 = vmatpush1.bf16.msra.mxu0 %v518
        %550 = vmatprep.subr.bf16.mxu0 0
        %551 = vmatpush2.bf16.msra.mxu0 0
        %552 = vmatprep.subr.bf16.mxu0 0
        %553 = vmatpush2.bf16.msra.mxu0 0
        %554 = vmatprep.subr.bf16.mxu0 0
        %555 = vmatpush2.bf16.msra.mxu0 0
        %556 = vmatprep.subr.bf16.mxu0 0
        %557 = vmatpush2.bf16.msra.mxu0 0
        %558 = vmatprep.subr.bf16.mxu0 0
        %559 = vmatpush2.bf16.msra.mxu0 0
        %560 = vmatprep.subr.bf16.mxu0 0
        %561 = vmatpush2.bf16.msra.mxu0 0
        %562 = vmatprep.subr.bf16.mxu0 0
        %563 = vmatpush2.bf16.msra.mxu0 0
        %564 = vmatprep.subr.bf16.mxu0 0
        %565 = vmatpush2.bf16.msra.mxu0 0
        %566 = vmatprep.mubr.bf16.mxu0 0
        %567 = vmatmul.mubr.bf16.gmra.mxu0 %v464
        %v568 = vpop.f32.mrf.mxu0
        %v569 = vadd.f32 %v485, %v568
        %v570 = vpop.f32.mrf.mxu0
        %v571 = vpop.f32.mrf.mxu0
        %v572 = vpop.f32.mrf.mxu0
        %573 = vdwg.mxu0
        %574 = vst [vmem:[%s283] sm:$0xff] %v569
        %s575 = sand.u32 %s142, 1
        %s576 = scalar_lea.sflag [#allocation4], %s575
        %s577 = sand.u32 %s142, 1
        %s578 = smul.addr %s577, 8
        %s579 = scalar_lea.vmem [#allocation10], %s578
        // Predicated region
        $region57: #{tpu_custom_call.1} parent=39 // pred_check
          %p580 = pneg %p152
        $region58: #{tpu_custom_call.1} parent=39 // pred_check_branch
          %582 = sbr.rel (%p580) target = $region60
        $region59: #{tpu_custom_call.1} parent=39 // pred_region
          %s584 = ssub.s32 128, 128
          %585 = vsyncadd %s576, %s584
          %s586 = smul.addr %s24, 128
          %s587 = scalar_lea.hbm %s5, %s586
          %s589 = sshll.u32 %s579, 4
          %s590 = int_to_ptr.vmem [resolvable:$true] %s589
          %592 = dma.vmem_to_hbm [thread:$0]  %s590, 128, %s587, %s576
        $region60: #{tpu_custom_call.1} parent=39 // pred_fallthru
          _
      $region40: #{tpu_custom_call.1} parent=5 // pred_fallthru
        _
      %p593 = scmp.le.s32.totalorder 2, %s19
      // Predicated region
      $region61: #{tpu_custom_call.1} parent=5 // pred_check
        %p594 = pneg %p593
      $region62: #{tpu_custom_call.1} parent=5 // pred_check_branch
        %596 = sbr.rel (%p594) target = $region64
      $region63: #{tpu_custom_call.1} parent=5 // pred_region
        %s597 = ssub.s32 %s19, 2
        // Predicated region
        $region65: #{tpu_custom_call.1} parent=63 // pred_check
          %p598 = pneg %p158
        $region66: #{tpu_custom_call.1} parent=63 // pred_check_branch
          %600 = sbr.rel (%p598) target = $region68
        $region67: #{tpu_custom_call.1} parent=63 // pred_region
          %s601 = sand.u32 %s143, 1
          %s602 = scalar_lea.sflag [#allocation4], %s601
          %s603 = sand.u32 %s143, 1
          %s604 = smul.addr %s603, 8
          %s605 = scalar_lea.vmem [#allocation10], %s604
          %606 = dma.done %s602, 128
        $region68: #{tpu_custom_call.1} parent=63 // pred_fallthru
          _
      $region64: #{tpu_custom_call.1} parent=5 // pred_fallthru
        _
    $region6: #{tpu_custom_call.1} parent=1 // loop_footer
      %s23 = sadd.s32 1, %s19
    $region7: #{tpu_custom_call.1} parent=1 // loop_footer_branch
      %18 = sbr.rel target = $region3
    $region8: #{tpu_custom_call.1} parent=1 // loop_exit
      _
    %607 = vsyncpa [#allocation3], 1
    %s608 = scalar_lea.sflag [#allocation3], 1
    %609 = vsyncpa %s608, 1
    %610 = vsyncpa [#allocation6], 1
    %611 = vsyncpa [#allocation9], 1
    %612 = vsyncpa [#allocation4], 1
    %s613 = scalar_lea.sflag [#allocation4], 1
    %614 = vsyncpa %s613, 1

</llo_original>
